<compile_context>
chip_gen: v7x
topology: tpu7x:2x2x1
jax: 0.10.0
libtpu: 0.0.40
codegen_flags: <defaults>
</compile_context>

<pallas_src>
import functools
import math
import warnings

import jax
import jax.numpy as jnp
from jax.experimental import pallas as pl
from jax.experimental.pallas import tpu as pltpu

MAX_LEN = 64
_XLA_FALLBACK_BYTES = 256 * 1024  # below this, pallas_call overhead dominates


# --------------------------------------------------------------------------- #
# Index glue (batch-invariant, computed in the wrapper, not in the kernel)
# --------------------------------------------------------------------------- #
def relative_position_bucket(rel_pos, causal=False, num_buckets=32, max_distance=MAX_LEN):
    """JAX port of T5RelativePositionBias._relative_position_bucket."""
    ret = jnp.zeros_like(rel_pos)
    n = -rel_pos
    if not causal:
        num_buckets //= 2
        ret = ret + (n < 0).astype(jnp.int32) * num_buckets
        n = jnp.abs(n)
    else:
        n = jnp.maximum(n, jnp.zeros_like(n))
    max_exact = num_buckets // 2
    is_small = n < max_exact
    # Clamp n >= 1 before the log so we never int-cast -inf (the value is masked
    # by the jnp.where anyway; int32(-inf) is implementation-defined).
    n_safe = jnp.maximum(n, 1).astype(jnp.float32)
    val_if_large = max_exact + (
        jnp.log(n_safe / max_exact)
        / math.log(max_distance / max_exact)
        * (num_buckets - max_exact)
    ).astype(jnp.int32)
    val_if_large = jnp.minimum(val_if_large, jnp.full_like(val_if_large, num_buckets - 1))
    ret = ret + jnp.where(is_small, n, val_if_large)
    return ret


# --------------------------------------------------------------------------- #
# Pallas kernel: pure broadcast-add, memory bound
# --------------------------------------------------------------------------- #
def _bias_add_kernel(bias_ref, qk_ref, out_ref):
    # bias_ref : (1, tl)   f32  pre-scaled relative-position bias (batch-invariant)
    # qk_ref   : (bt, tl)       a block of attention logits (aliased with out)
    # out_ref  : (bt, tl)
    # Single fused load-add-store.  Add in f32; cast the *sum* on store so the
    # rounding order matches the reference even for bf16 logits.
    out_ref[...] = (qk_ref[...].astype(jnp.float32) + bias_ref[...]).astype(out_ref.dtype)


# --------------------------------------------------------------------------- #
# Tiling
# --------------------------------------------------------------------------- #
def _sublane_multiple(dtype):
    # packed sublane tile: f32 -> 8 rows/vreg, bf16 -> 16, int8/fp8 -> 32
    return {4: 8, 2: 16, 1: 32}.get(jnp.dtype(dtype).itemsize, 8)


def _divisors(n):
    divs = set()
    i = 1
    while i * i <= n:
        if n % i == 0:
            divs.add(i)
            divs.add(n // i)
        i += 1
    return sorted(divs)


def _tile_candidates(n, unit):
    # Blocks must be a multiple of `unit` along this dim OR span the full dim.
    return [d for d in _divisors(n) if d % unit == 0 or d == n]


def _tpu_generation_params():
    try:
        kind = jax.devices()[0].device_kind.lower()
    except Exception:  # pragma: no cover - defensive
        kind = ""
    if "v7" in kind:
        # v7x: 3.2 TB/s HBM (per-step overhead matters more) but only 64 MiB
        # VMEM and 2 TensorCores -> bigger tiles, even step count preferred.
        return {"target_bytes": 4 << 20, "num_tc": 2}
    # v5e: 16 MiB default scoped VMEM; v6e: 32 MiB.  2 MiB/buffer keeps the
    # double-buffered in+out+bias footprint well under both defaults.
    return {"target_bytes": 2 << 20, "num_tc": 1}


def _pick_tiles(B, HIJ, itemsize, sublane, *, target_bytes, num_tc):
    """Pick (batch_tile, lane_tile) with lane_tile % 128 == 0 (or full row) and
    batch_tile % sublane == 0 (or full batch), tile <= target_bytes."""
    bt_cands = _tile_candidates(B, sublane)
    tl_cands = _tile_candidates(HIJ, 128)

    best = None
    for bt in bt_cands:
        for tl in tl_cands:
            tile_bytes = bt * tl * itemsize
            fits = tile_bytes <= target_bytes
            # Prefer fitting tiles; among fitting, largest tile then lane-densest;
            # among non-fitting (no valid small factorization), smallest tile.
            key = (fits, bt * tl if fits else -(bt * tl), tl)
            if best is None or key > best[0]:
                best = (key, bt, tl)
    _, bt, tl = best

    # Megacore (v7x): an odd / single step count leaves one TensorCore idle or
    # 50% under-loaded on a mem-bound kernel.  Only worth splitting above ~1 MiB.
    if num_tc > 1 and B * HIJ * itemsize > (1 << 20):
        steps = (B // bt) * (HIJ // tl)
        if steps % 2 == 1:
            even_tl = [c for c in tl_cands if c < tl and (HIJ // c) % 2 == 0]
            if even_tl:
                tl = max(even_tl)
            else:
                even_bt = [c for c in bt_cands if c < bt and (B // c) % 2 == 0]
                if even_bt:
                    bt = max(even_bt)
    return bt, tl


# --------------------------------------------------------------------------- #
# Public wrapper
# --------------------------------------------------------------------------- #
def t5_relative_position_bias(qk_dots, emb_weight, *, scale, causal=False,
                              num_buckets=32, max_distance=MAX_LEN,
                              force_pallas=False):
    """Forward of T5RelativePositionBias: out = qk_dots + bias * scale.

    qk_dots: (B, H, I, J) attention logits; emb_weight: (num_buckets, H)
    (the nn.Embedding weight).

    NOTE (performance contract): the Pallas path aliases the logits buffer with
    the output (in-place add).  The caller should donate qk_dots
    (jax.jit(..., donate_argnums=...)) so XLA does not insert a defensive copy.
    """
    B, H, I, J = qk_dots.shape
    HIJ = H * I * J
    itemsize = jnp.dtype(qk_dots.dtype).itemsize

    # ---- batch-invariant bias (index glue; computed once, outside the kernel) ----
    q_pos = jnp.arange(J - I, J, dtype=jnp.int32)
    k_pos = jnp.arange(J, dtype=jnp.int32)
    rel_pos = k_pos[None, :] - q_pos[:, None]                               # (I, J)
    rp_bucket = relative_position_bucket(rel_pos, causal=causal,
                                         num_buckets=num_buckets,
                                         max_distance=max_distance)         # (I, J) int32
    values = emb_weight.astype(jnp.float32)[rp_bucket]                      # (I, J, H) gather
    bias = jnp.transpose(values, (2, 0, 1)) * jnp.float32(scale)            # (H, I, J), scale folded in

    total_bytes = B * HIJ * itemsize
    if not force_pallas and total_bytes < _XLA_FALLBACK_BYTES:
        # Tiny logits: pallas_call launch / DMA setup dominates -> let XLA fuse.
        return (qk_dots.astype(jnp.float32) + bias[None]).astype(qk_dots.dtype)

    # ---- lane-dense flattened layout ----
    bias_flat = bias.reshape(1, HIJ)                                        # f32
    qk_flat = qk_dots.reshape(B, HIJ)

    params = _tpu_generation_params()
    bt, tl = _pick_tiles(B, HIJ, itemsize, _sublane_multiple(qk_dots.dtype),
                         target_bytes=params["target_bytes"],
                         num_tc=params["num_tc"])

    # Grid order: lane tile outermost, batch innermost.  The bias block index
    # (0, j) is then constant across the inner batch loop, so its DMA is not
    # re-issued on consecutive steps; stores stay full-width (tl is a multiple
    # of 128 or the full row).
    grid = (HIJ // tl, B // bt)

    out = pl.pallas_call(
        _bias_add_kernel,
        out_shape=jax.ShapeDtypeStruct((B, HIJ), qk_dots.dtype),
        grid=grid,
        in_specs=[
            pl.BlockSpec((1, tl), lambda j, b: (0, j)),     # bias: batch-invariant
            pl.BlockSpec((bt, tl), lambda j, b: (b, j)),    # logits block
        ],
        out_specs=pl.BlockSpec((bt, tl), lambda j, b: (b, j)),
        input_output_aliases={1: 0},                        # in-place add on the logits
        compiler_params=pltpu.CompilerParams(
            dimension_semantics=("parallel", "parallel"),
        ),
    )(bias_flat, qk_flat)

    return out.reshape(B, H, I, J)


# --------------------------------------------------------------------------- #
# Demo / self-test
# --------------------------------------------------------------------------- #
if __name__ == "__main__":
    # Small shapes consistent with the module: qk_dots (B, heads, i, j)
    B, H, SEQ = 2, 12, 8
    NUM_BUCKETS = 32
    SCALE = 0.125          # e.g. 1/sqrt(dim_head) with dim_head=64
    CAUSAL = False

    key = jax.random.PRNGKey(0)
    k_qk, k_emb = jax.random.split(key)
    qk_dots = jax.random.normal(k_qk, (B, H, SEQ, SEQ), dtype=jnp.float32)
    emb_weight = jax.random.normal(k_emb, (NUM_BUCKETS, H), dtype=jnp.float32)

    # Pure-JAX reference (same semantics as the PyTorch forward).  Computed
    # BEFORE the kernel call because the jitted call below donates qk_dots.
    q_pos = jnp.arange(SEQ - SEQ, SEQ, dtype=jnp.int32)
    k_pos = jnp.arange(SEQ, dtype=jnp.int32)
    rel_pos = k_pos[None, :] - q_pos[:, None]
    rp_bucket = relative_position_bucket(rel_pos, causal=CAUSAL,
                                         num_buckets=NUM_BUCKETS, max_distance=MAX_LEN)
    values = emb_weight[rp_bucket]                          # (i, j, h)
    bias = jnp.transpose(values, (2, 0, 1))                 # (h, i, j)
    ref = jax.block_until_ready(qk_dots + bias[None] * SCALE)

    # Donate qk_dots so input_output_aliases is a true in-place add (no
    # defensive HBM copy).  force_pallas so the tiny demo still runs the kernel.
    warnings.filterwarnings("ignore", message=".*donated.*")  # harmless if alias can't propagate
    run = jax.jit(
        functools.partial(t5_relative_position_bias, scale=SCALE, causal=CAUSAL,
                          num_buckets=NUM_BUCKETS, max_distance=MAX_LEN,
                          force_pallas=True),
        donate_argnums=(0,),
    )
    out = jax.block_until_ready(run(qk_dots, emb_weight))

    assert out.shape == (B, H, SEQ, SEQ)
    assert jnp.allclose(out, ref, atol=1e-5, rtol=1e-5), "mismatch vs reference"
    print("KERNEL_OK")
</pallas_src>

<mosaic_0001>
module attributes {stable_mosaic.version = 11 : i64} {
  func.func @_bias_add_kernel(%arg0: i32, %arg1: i32, %arg2: memref<1x768xf32, #tpu.memory_space<vmem>>, %arg3: memref<2x768xf32, #tpu.memory_space<vmem>>, %arg4: memref<2x768xf32, #tpu.memory_space<vmem>>) attributes {dimension_semantics = [#tpu.dimension_semantics<parallel>, #tpu.dimension_semantics<parallel>], iteration_bounds = array<i64: 1, 1>, scalar_prefetch = 0 : i64, scratch_operands = 0 : i64, tpu.core_type = #tpu.core_type<tc>, window_params = [{transform_indices = @transform_0, window_bounds = array<i64: 1, 768>}, {transform_indices = @transform_1, window_bounds = array<i64: 2, 768>}, {transform_indices = @transform_2, window_bounds = array<i64: 2, 768>}]} {
    %c0 = arith.constant 0 : index
    %c0_0 = arith.constant 0 : index
    %0 = vector.load %arg3[%c0, %c0_0] : memref<2x768xf32, #tpu.memory_space<vmem>>, vector<2x768xf32>
    %c0_1 = arith.constant 0 : index
    %c0_2 = arith.constant 0 : index
    %1 = vector.load %arg2[%c0_1, %c0_2] : memref<1x768xf32, #tpu.memory_space<vmem>>, vector<1x768xf32>
    %2 = vector.broadcast %1 : vector<1x768xf32> to vector<2x768xf32>
    %3 = arith.addf %0, %2 : vector<2x768xf32>
    %c0_3 = arith.constant 0 : index
    %c0_4 = arith.constant 0 : index
    %4 = vector.load %arg4[%c0_3, %c0_4] : memref<2x768xf32, #tpu.memory_space<vmem>>, vector<2x768xf32>
    tpu.vector_store %arg4[%c0_3, %c0_4], %3 {strides = array<i32>} : memref<2x768xf32, #tpu.memory_space<vmem>>, vector<2x768xf32>,
    return
  }
  func.func @transform_0(%arg0: i32, %arg1: i32) -> (i32, i32) {
    %c0_i32 = arith.constant 0 : i32
    %c0_i32_0 = arith.constant 0 : i32
    return %c0_i32, %arg0 : i32, i32
  }
  func.func @transform_1(%arg0: i32, %arg1: i32) -> (i32, i32) {
    %c0_i32 = arith.constant 0 : i32
    return %arg1, %arg0 : i32, i32
  }
  func.func @transform_2(%arg0: i32, %arg1: i32) -> (i32, i32) {
    %c0_i32 = arith.constant 0 : i32
    return %arg1, %arg0 : i32, i32
  }
}

</mosaic_0001>

<llo_original>
// kernel: t5_relative_position_bias.1
$region0: #{t5_relative_position_bias.1}
  #allocation0 [shape = 'u32[]', space=smem, size = 0x4, offset = 0x4, fixed_abs, tag = 'smem constant byte address 0x4 - core index']
  #allocation1 [shape = 'u32[144,128]{1,0:T(1,128)}', space=vmem, size = 0x12000, scoped, tag = 'internal scratch']
  %s0 = inlined_call_operand.vmem [shape: f32[1,768], index: 0, kind: input, shape index: {}]
  %s1 = inlined_call_operand.vmem [shape: f32[2,768], index: 1, kind: input, shape index: {}, may-alias: {1,2}]
  %s2 = inlined_call_operand.vmem [shape: f32[2,768], index: 2, kind: output, shape index: {}, may-alias: {1,2}]
  %s3 = sld [smem:[#allocation0]]
  $region18: #{t5_relative_position_bias.1} parent=0
    _
  %s5 = ssub.s32 1, %s3
  %s6 = scalar_select 0, %s5, %s3
  // Predicated region
  $region2: #{t5_relative_position_bias.1} parent=0 // pred_check
    _
  $region3: #{t5_relative_position_bias.1} parent=0 // pred_check_branch
    %8 = sbr.rel (0) target = $region5
  $region4: #{t5_relative_position_bias.1} parent=0 // pred_region
    _
  $region5: #{t5_relative_position_bias.1} parent=0 // pred_fallthru
    _
  // Predicated region
  $region6: #{t5_relative_position_bias.1} parent=0 // pred_check
    _
  $region7: #{t5_relative_position_bias.1} parent=0 // pred_check_branch
    %10 = sbr.rel (0) target = $region9
  $region8: #{t5_relative_position_bias.1} parent=0 // pred_region
    _
  $region9: #{t5_relative_position_bias.1} parent=0 // pred_fallthru
    _
  %v11 = vld [vmem:[%s1] sm:$0xff]
  %v12 = vld [vmem:[%s1 + $0x8] sm:$0xf]
  %v13 = vld [vmem:[%s0] sm:$0x3f]
  %v15 = vlaneseq
  %v16 = vshrl.u32 %v15, 7
  %v17 = vsub.s32 0, %v16
  %v18 = vrot.slane %v13, %v17
  %v19 = vlaneseq
  %v20 = vshrl.u32 %v19, 7
  %v21 = vsub.s32 1, %v20
  %v22 = vrot.slane %v13, %v21
  %v23 = vlaneseq
  %v24 = vshrl.u32 %v23, 7
  %v25 = vsub.s32 2, %v24
  %v26 = vrot.slane %v13, %v25
  %v27 = vlaneseq
  %v28 = vshrl.u32 %v27, 7
  %v29 = vsub.s32 3, %v28
  %v30 = vrot.slane %v13, %v29
  %v31 = vlaneseq
  %v32 = vshrl.u32 %v31, 7
  %v33 = vsub.s32 4, %v32
  %v34 = vrot.slane %v13, %v33
  %v35 = vlaneseq
  %v36 = vshrl.u32 %v35, 7
  %v37 = vsub.s32 5, %v36
  %v38 = vrot.slane %v13, %v37
  %v39 = vcombine.low %v18, %v22
  %v40 = vcombine.low %v26, %v30
  %v42 = vunpack.c.l.s4 1983009808
  %v43 = vunpack.c.0.s8 %v42
  %v44 = vlaneseq
  %v45 = vshrl.u32 %v44, 7
  %v46 = vsub.s32 %v43, %v45
  %v47 = vrot.slane %v39, %v46
  %v49 = vunpack.c.l.s4 1983009808
  %v50 = vunpack.c.0.s8 %v49
  %v51 = vlaneseq
  %v52 = vshrl.u32 %v51, 7
  %v53 = vsub.s32 %v50, %v52
  %v54 = vrot.slane %v40, %v53
  %v55 = vcombine.low %v47, %v54
  %v56 = vcombine.low %v34, %v38
  %v58 = vunpack.c.l.s4 1983009808
  %v59 = vunpack.c.0.s8 %v58
  %v60 = vlaneseq
  %v61 = vshrl.u32 %v60, 7
  %v62 = vsub.s32 %v59, %v61
  %v63 = vrot.slane %v56, %v62
  %v66 = vadd.f32 %v11, %v55
  %v67 = vadd.f32 %v12, %v63
  %68 = vst [vmem:[%s2] sm:$0xff] %v66
  %69 = vst [vmem:[%s2 + $0x8] sm:$0xf] %v67
  // Predicated region
  $region10: #{t5_relative_position_bias.1} parent=0 // pred_check
    _
  $region11: #{t5_relative_position_bias.1} parent=0 // pred_check_branch
    %71 = sbr.rel (0) target = $region13
  $region12: #{t5_relative_position_bias.1} parent=0 // pred_region
    _
  $region13: #{t5_relative_position_bias.1} parent=0 // pred_fallthru
    _
  // Predicated region
  $region14: #{t5_relative_position_bias.1} parent=0 // pred_check
    _
  $region15: #{t5_relative_position_bias.1} parent=0 // pred_check_branch
    %73 = sbr.rel (0) target = $region17
  $region16: #{t5_relative_position_bias.1} parent=0 // pred_region
    _
  $region17: #{t5_relative_position_bias.1} parent=0 // pred_fallthru
    _

</llo_original>
